<compile_context>
chip_gen: v7x
topology: tpu7x:2x2x1
jax: 0.10.0
libtpu: 0.0.40
codegen_flags: <defaults>
</compile_context>

<pallas_src>
import jax
import jax.numpy as jnp
from jax.experimental import pallas as pl
from jax.experimental.pallas import tpu as pltpu

_LANES = 512  # lane-dense slab width (multiple of the 128-lane vreg width)


def _linear11_kernel(w_ref, b_ref, x_ref, o_ref):
    # w_ref, b_ref: (1, 1) scalars in SMEM; x_ref / o_ref: (r, 512) f32 VMEM blocks.
    w = w_ref[0, 0]
    b = b_ref[0, 0]
    o_ref[...] = x_ref[...] * w + b


def _pick_config():
    """Block size / scoped-VMEM limit per TPU generation (default = v7x-safe)."""
    block_rows = 2048                 # 4 MiB f32 block -> 16 MiB double-buffered in+out
    vmem_limit = 32 * 1024 * 1024
    try:
        # v5e / v6e have 128 MiB physical VMEM -> larger blocks amortize the
        # ~0.35 us per-grid-step overhead at zero risk.
        vmem_bytes = getattr(pltpu.get_tpu_info(), "vmem_capacity_bytes", None)
        if vmem_bytes is not None and vmem_bytes >= 96 * 1024 * 1024:
            block_rows = 4096         # 8 MiB block -> 32 MiB double-buffered in+out
            vmem_limit = 64 * 1024 * 1024
    except Exception:
        pass                          # conservative defaults work on every generation
    return block_rows, vmem_limit


def _linear11_bulk(x2d, w2, b2, *, block_rows, vmem_limit):
    rows, lanes = x2d.shape
    r = min(block_rows, rows)
    if rows >= 16:
        # v7x: keep >= 2 grid steps so the 'parallel' axis shards over both TCs.
        r = min(r, (rows + 1) // 2)
    r = max(8, (r // 8) * 8)          # sublane-aligned block height
    grid = (pl.cdiv(rows, r),)        # ragged last row-block is masked by Pallas
    n_elems = rows * lanes

    return pl.pallas_call(
        _linear11_kernel,
        out_shape=jax.ShapeDtypeStruct((rows, lanes), jnp.float32),
        grid_spec=pl.GridSpec(
            grid=grid,
            in_specs=[
                pl.BlockSpec(memory_space=pltpu.MemorySpace.SMEM),  # weight (1,1)
                pl.BlockSpec(memory_space=pltpu.MemorySpace.SMEM),  # bias   (1,1)
                pl.BlockSpec((r, lanes), lambda i: (i, 0)),         # x block
            ],
            out_specs=pl.BlockSpec((r, lanes), lambda i: (i, 0)),   # y block
        ),
        compiler_params=pltpu.CompilerParams(
            dimension_semantics=("parallel",),   # lets v7x shard row-blocks over 2 TCs
            vmem_limit_bytes=vmem_limit,
        ),
        cost_estimate=pl.CostEstimate(
            flops=2 * n_elems, transcendentals=0, bytes_accessed=2 * 4 * n_elems),
    )(w2, b2, x2d)


def copy_number_model(x, weight, bias, *, lanes=_LANES):
    """x: (N, 1) f32; weight: (1, 1) f32; bias: (1,) f32 -- same as nn.Linear(1, 1)."""
    N, F = x.shape
    assert F == 1, "CopyNumberModel expects in_features == 1"

    xf = x.reshape(-1).astype(jnp.float32)        # free bitcast (in_features == 1)
    w_s = weight.reshape(()).astype(jnp.float32)
    b_s = bias.reshape(()).astype(jnp.float32)
    n_total = xf.shape[0]

    # Tiny or empty inputs: Pallas launch overhead dominates -> plain fused XLA.
    if n_total <= lanes:
        return (xf * w_s + b_s).reshape(N, 1)

    block_rows, vmem_limit = _pick_config()
    w2 = w_s.reshape(1, 1)
    b2 = b_s.reshape(1, 1)

    bulk_rows = n_total // lanes
    bulk = bulk_rows * lanes

    if bulk == n_total:
        # Fully copy-free path: reshapes in/out are bitcasts, no pad, no slice.
        y2d = _linear11_bulk(xf.reshape(bulk_rows, lanes), w2, b2,
                             block_rows=block_rows, vmem_limit=vmem_limit)
        return y2d.reshape(N, 1)

    # Ragged tail (< lanes elements): Pallas over the bulk, tiny tail in plain XLA.
    y_bulk = _linear11_bulk(xf[:bulk].reshape(bulk_rows, lanes), w2, b2,
                            block_rows=block_rows, vmem_limit=vmem_limit).reshape(-1)
    y_tail = xf[bulk:] * w_s + b_s
    return jnp.concatenate([y_bulk, y_tail]).reshape(N, 1)


if __name__ == "__main__":
    key = jax.random.PRNGKey(0)
    kx, kw, kb = jax.random.split(key, 3)

    # Deterministic parameters (mimics PyTorch's U(-1, 1) init for in_features=1).
    weight = jax.random.uniform(kw, (1, 1), minval=-1.0, maxval=1.0, dtype=jnp.float32)
    bias = jax.random.uniform(kb, (1,), minval=-1.0, maxval=1.0, dtype=jnp.float32)

    # Exercise every dispatch path: tiny (pure XLA), lane-multiple (copy-free
    # Pallas), and ragged (Pallas bulk + masked boundary block + XLA tail).
    for N in (200, 4096, 5000):
        x = jax.random.normal(kx, (N, 1), dtype=jnp.float32)
        y = copy_number_model(x, weight, bias)
        jax.block_until_ready(y)

        y_ref = x @ weight.T + bias
        assert y.shape == (N, 1)
        assert jnp.allclose(y, y_ref, atol=1e-6), f"mismatch vs reference at N={N}"

    print("KERNEL_OK")
</pallas_src>

<mosaic_0001>
module attributes {stable_mosaic.version = 11 : i64} {
  func.func @_linear11_kernel(%arg0: i32, %arg1: memref<1x1xf32, #tpu.memory_space<smem>>, %arg2: memref<1x1xf32, #tpu.memory_space<smem>>, %arg3: memref<8x512xf32, #tpu.memory_space<vmem>>, %arg4: memref<8x512xf32, #tpu.memory_space<vmem>>) attributes {dimension_semantics = [#tpu.dimension_semantics<parallel>], iteration_bounds = array<i64: 1>, scalar_prefetch = 0 : i64, scratch_operands = 0 : i64, tpu.core_type = #tpu.core_type<tc>, window_params = [{transform_indices = @transform_0, window_bounds = array<i64: 1, 1>}, {transform_indices = @transform_1, window_bounds = array<i64: 1, 1>}, {transform_indices = @transform_2, window_bounds = array<i64: 8, 512>}, {transform_indices = @transform_3, window_bounds = array<i64: 8, 512>}]} {
    %c0 = arith.constant 0 : index
    %c0_0 = arith.constant 0 : index
    %0 = memref.load %arg1[%c0, %c0_0] : memref<1x1xf32, #tpu.memory_space<smem>>
    %c0_1 = arith.constant 0 : index
    %c0_2 = arith.constant 0 : index
    %1 = memref.load %arg2[%c0_1, %c0_2] : memref<1x1xf32, #tpu.memory_space<smem>>
    %c0_3 = arith.constant 0 : index
    %c0_4 = arith.constant 0 : index
    %2 = vector.load %arg3[%c0_3, %c0_4] : memref<8x512xf32, #tpu.memory_space<vmem>>, vector<8x512xf32>
    %3 = vector.broadcast %0 : f32 to vector<8x512xf32>
    %4 = arith.mulf %2, %3 : vector<8x512xf32>
    %5 = vector.broadcast %1 : f32 to vector<8x512xf32>
    %6 = arith.addf %4, %5 : vector<8x512xf32>
    %c0_5 = arith.constant 0 : index
    %c0_6 = arith.constant 0 : index
    %7 = vector.load %arg4[%c0_5, %c0_6] : memref<8x512xf32, #tpu.memory_space<vmem>>, vector<8x512xf32>
    tpu.vector_store %arg4[%c0_5, %c0_6], %6 {strides = array<i32>} : memref<8x512xf32, #tpu.memory_space<vmem>>, vector<8x512xf32>,
    return
  }
  func.func @transform_0(%arg0: i32) -> (i32, i32) {
    %c0_i32 = arith.constant 0 : i32
    %c0_i32_0 = arith.constant 0 : i32
    %c0_i32_1 = arith.constant 0 : i32
    return %c0_i32, %c0_i32_0 : i32, i32
  }
  func.func @transform_1(%arg0: i32) -> (i32, i32) {
    %c0_i32 = arith.constant 0 : i32
    %c0_i32_0 = arith.constant 0 : i32
    %c0_i32_1 = arith.constant 0 : i32
    return %c0_i32, %c0_i32_0 : i32, i32
  }
  func.func @transform_2(%arg0: i32) -> (i32, i32) {
    %c0_i32 = arith.constant 0 : i32
    %c0_i32_0 = arith.constant 0 : i32
    return %arg0, %c0_i32 : i32, i32
  }
  func.func @transform_3(%arg0: i32) -> (i32, i32) {
    %c0_i32 = arith.constant 0 : i32
    %c0_i32_0 = arith.constant 0 : i32
    return %arg0, %c0_i32 : i32, i32
  }
}

</mosaic_0001>

<llo_original>
// kernel: tpu_custom_call.1
$region0: #{tpu_custom_call.1}
  #allocation0 [shape = 'u32[]', space=smem, size = 0x4, offset = 0x4, fixed_abs, tag = 'smem constant byte address 0x4 - core index']
  #allocation1 [shape = 'u32[144,128]{1,0:T(1,128)}', space=vmem, size = 0x12000, scoped, tag = 'internal scratch']
  #allocation2 [shape = 'f32[1,1]{1,0:T(1,128)S(6)}', space=smem, size = 0x200, scoped, tag = 'scoped memory for tpu_custom_call.1']
  #allocation3 [shape = 'f32[1,1]{1,0:T(1,128)S(6)}', space=smem, size = 0x200, scoped, tag = 'scoped memory for tpu_custom_call.1']
  %s0 = inlined_call_operand.<no memory space> [shape: f32[1,1], index: 0, kind: input, shape index: {}]
  %s1 = inlined_call_operand.<no memory space> [shape: f32[1,1], index: 1, kind: input, shape index: {}]
  %s2 = inlined_call_operand.hbm [shape: f32[8,512], index: 2, kind: input, shape index: {}]
  %s3 = inlined_call_operand.hbm [shape: f32[8,512], index: 3, kind: output, shape index: {}]
  %s4 = sld [smem:[#allocation0]]
  $region26: #{tpu_custom_call.1} parent=0
    _
  %s6 = ssub.s32 1, %s4
  %s7 = scalar_select 0, %s6, %s4
  %8 = sst [smem:[#allocation2]] %s0
  %9 = sst [smem:[#allocation3]] %s1
  $region1: #{tpu_custom_call.1} parent=0
    #allocation4 [shape = 'u8[16384]{0}', space=vmem, size = 0x4000, scoped, tag = 'input window, operand 2, single buffered']
    #allocation5 [shape = 's32[1]{0}', space=sflag, size = 0x4, scoped, tag = 'scoped memory for tpu_custom_call.1']
    #allocation6 [shape = 's32[1]{0}', space=sflag, size = 0x4, scoped, tag = 'scoped memory for tpu_custom_call.1']
    #allocation7 [shape = 'u8[16384]{0}', space=vmem, size = 0x4000, scoped, tag = 'output window, operand 0, single buffered']
    %10 = vsyncpa [#allocation5], 0
    %11 = vsyncpa [#allocation6], 0
    // Predicated region
    $region2: #{tpu_custom_call.1} parent=1 // pred_check
      _
    $region3: #{tpu_custom_call.1} parent=1 // pred_check_branch
      %13 = sbr.rel (0) target = $region5
    $region4: #{tpu_custom_call.1} parent=1 // pred_region
      _
    $region5: #{tpu_custom_call.1} parent=1 // pred_fallthru
      _
    // Predicated region
    $region6: #{tpu_custom_call.1} parent=1 // pred_check
      _
    $region7: #{tpu_custom_call.1} parent=1 // pred_check_branch
      %15 = sbr.rel (0) target = $region9
    $region8: #{tpu_custom_call.1} parent=1 // pred_region
      _
    $region9: #{tpu_custom_call.1} parent=1 // pred_fallthru
      _
    // Predicated region
    $region10: #{tpu_custom_call.1} parent=1 // pred_check
      _
    $region11: #{tpu_custom_call.1} parent=1 // pred_check_branch
      %17 = sbr.rel (0) target = $region13
    $region12: #{tpu_custom_call.1} parent=1 // pred_region
      %s19 = ssub.s32 512, 512
      %20 = vsyncadd [#allocation5], %s19
      %s22 = sshll.u32 [#allocation4], 4
      %s23 = int_to_ptr.vmem [resolvable:$true] %s22
      %25 = dma.hbm_to_vmem [thread:$0]  %s2, 512, %s23, [#allocation5]
    $region13: #{tpu_custom_call.1} parent=1 // pred_fallthru
      _
    // Predicated region
    $region14: #{tpu_custom_call.1} parent=1 // pred_check
      _
    $region15: #{tpu_custom_call.1} parent=1 // pred_check_branch
      %27 = sbr.rel (0) target = $region17
    $region16: #{tpu_custom_call.1} parent=1 // pred_region
      %28 = dma.done [#allocation5], 512
    $region17: #{tpu_custom_call.1} parent=1 // pred_fallthru
      _
    %s29 = sld [smem:[#allocation2]]
    %s30 = sld [smem:[#allocation3]]
    %v31 = vld [vmem:[#allocation4] sm:$0xff]
    %v32 = vld [vmem:[#allocation4 + $0x8] sm:$0xff]
    %v33 = vld [vmem:[#allocation4 + $0x10] sm:$0xff]
    %v34 = vld [vmem:[#allocation4 + $0x18] sm:$0xff]
    %v35 = vstv %s29
    %v36 = vmul.f32 %v31, %v35
    %v37 = vmul.f32 %v32, %v35
    %v38 = vmul.f32 %v33, %v35
    %v39 = vmul.f32 %v34, %v35
    %v40 = vstv %s30
    %v41 = vadd.f32 %v36, %v40
    %v42 = vadd.f32 %v37, %v40
    %v43 = vadd.f32 %v38, %v40
    %v44 = vadd.f32 %v39, %v40
    %45 = vst [vmem:[#allocation7] sm:$0xff] %v41
    %46 = vst [vmem:[#allocation7 + $0x8] sm:$0xff] %v42
    %47 = vst [vmem:[#allocation7 + $0x10] sm:$0xff] %v43
    %48 = vst [vmem:[#allocation7 + $0x18] sm:$0xff] %v44
    // Predicated region
    $region18: #{tpu_custom_call.1} parent=1 // pred_check
      _
    $region19: #{tpu_custom_call.1} parent=1 // pred_check_branch
      %50 = sbr.rel (0) target = $region21
    $region20: #{tpu_custom_call.1} parent=1 // pred_region
      %s52 = ssub.s32 512, 512
      %53 = vsyncadd [#allocation6], %s52
      %s55 = sshll.u32 [#allocation7], 4
      %s56 = int_to_ptr.vmem [resolvable:$true] %s55
      %58 = dma.vmem_to_hbm [thread:$0]  %s56, 512, %s3, [#allocation6]
    $region21: #{tpu_custom_call.1} parent=1 // pred_fallthru
      _
    // Predicated region
    $region22: #{tpu_custom_call.1} parent=1 // pred_check
      _
    $region23: #{tpu_custom_call.1} parent=1 // pred_check_branch
      %60 = sbr.rel (0) target = $region25
    $region24: #{tpu_custom_call.1} parent=1 // pred_region
      %61 = dma.done [#allocation6], 512
    $region25: #{tpu_custom_call.1} parent=1 // pred_fallthru
      _
    %62 = vsyncpa [#allocation5], 1
    %63 = vsyncpa [#allocation6], 1

</llo_original>
